<compile_context>
chip_gen: v6e
topology: v6e:2x2x1
jax: 0.10.0
libtpu: 0.0.40
codegen_flags: <defaults>
</compile_context>

<pallas_src>
import jax
import jax.numpy as jnp
from jax.experimental import pallas as pl
from jax.experimental.pallas import tpu as pltpu


def _linear_kernel(x_ref, w_ref, b_ref, o_ref, acc_ref):
    # x_ref: (tm, tk), w_ref: (tk, tn), b_ref: (1, tn), o_ref/acc_ref: (tm, tn)
    k = pl.program_id(2)

    @pl.when(k == 0)
    def _():
        # Fold the bias into the accumulator init: finalize is then just a cast.
        acc_ref[...] = jnp.broadcast_to(
            b_ref[...].astype(jnp.float32), acc_ref.shape
        )

    # MXU matmul with f32 accumulation; no transpose inside the kernel.
    acc_ref[...] += jnp.dot(
        x_ref[...], w_ref[...], preferred_element_type=jnp.float32
    )

    @pl.when(k == pl.num_programs(2) - 1)
    def _():
        o_ref[...] = acc_ref[...].astype(o_ref.dtype)


def _round_up(x, m):
    return ((x + m - 1) // m) * m


def logistic_regression_forward(x, weight, bias, *, tm=256, tn=256, tk=512):
    """y = x @ weight.T + bias, matching torch.nn.Linear.

    x: (B, D_in), weight: (D_out, D_in) (PyTorch layout), bias: (D_out,).
    Tile sizes are clamped to the (padded) problem size and obey the (8, 128)
    layout constraints; defaults feed the 2x256^2 MXU while staying well inside
    v7x's 64 MiB VMEM with double buffering.
    """
    B, D_in = x.shape
    D_out = weight.shape[0]
    dtype = x.dtype

    # Pre-transpose once in the wrapper (kernel sees (D_in, D_out)).
    w_t = weight.T

    # Clamp tiles to the (padded) problem, respecting sublane/lane alignment.
    tm = min(tm, _round_up(B, 8))
    tn = min(tn, _round_up(D_out, 128))
    tk = min(tk, _round_up(D_in, 128))

    Mp = _round_up(B, tm)
    Kp = _round_up(D_in, tk)
    Np = _round_up(D_out, tn)

    # Zero-pad to tile-aligned shapes (padded rows/cols sliced away at the end).
    if (Mp, Kp) != (B, D_in):
        x_p = jnp.zeros((Mp, Kp), dtype).at[:B, :D_in].set(x)
    else:
        x_p = x
    if (Kp, Np) != (D_in, D_out):
        w_p = jnp.zeros((Kp, Np), dtype).at[:D_in, :D_out].set(w_t)
    else:
        w_p = w_t
    b_p = jnp.zeros((1, Np), dtype).at[0, :D_out].set(bias)

    grid = (Mp // tm, Np // tn, Kp // tk)

    itemsize = jnp.dtype(dtype).itemsize
    cost = pl.CostEstimate(
        flops=2 * B * D_in * D_out,
        transcendentals=0,
        bytes_accessed=(x.size + weight.size + bias.size + B * D_out) * itemsize,
    )

    out_p = pl.pallas_call(
        _linear_kernel,
        out_shape=jax.ShapeDtypeStruct((Mp, Np), dtype),
        grid_spec=pltpu.PrefetchScalarGridSpec(
            num_scalar_prefetch=0,
            grid=grid,
            in_specs=[
                pl.BlockSpec((tm, tk), lambda i, j, k: (i, k)),   # x tile
                pl.BlockSpec((tk, tn), lambda i, j, k: (k, j)),   # W^T tile
                pl.BlockSpec((1, tn), lambda i, j, k: (0, j)),    # bias tile
            ],
            out_specs=pl.BlockSpec((tm, tn), lambda i, j, k: (i, j)),
            scratch_shapes=[pltpu.VMEM((tm, tn), jnp.float32)],
        ),
        compiler_params=pltpu.CompilerParams(
            dimension_semantics=("parallel", "parallel", "arbitrary"),
        ),
        cost_estimate=cost,
    )(x_p, w_p, b_p)

    return out_p[:B, :D_out]


if __name__ == "__main__":
    key = jax.random.PRNGKey(0)

    # --- Test 1: small shapes consistent with Logistic_Regression(input_dim, output_dim)
    batch, input_dim, output_dim = 8, 32, 16
    kx, kw, kb, key = jax.random.split(key, 4)
    x = jax.random.normal(kx, (batch, input_dim), dtype=jnp.float32)
    bound = 1.0 / (input_dim ** 0.5)
    weight = jax.random.uniform(
        kw, (output_dim, input_dim), minval=-bound, maxval=bound, dtype=jnp.float32
    )
    bias = jax.random.uniform(
        kb, (output_dim,), minval=-bound, maxval=bound, dtype=jnp.float32
    )

    out = jax.block_until_ready(logistic_regression_forward(x, weight, bias))
    ref = x @ weight.T + bias
    assert out.shape == (batch, output_dim)
    assert jnp.allclose(out, ref, atol=1e-5, rtol=1e-5)

    # --- Test 2: exercise the tiled (M, N, K) grid + accumulator/pl.when path
    b2, d_in2, d_out2 = 16, 384, 160
    kx2, kw2, kb2, key = jax.random.split(key, 4)
    x2 = jax.random.normal(kx2, (b2, d_in2), dtype=jnp.float32)
    bound2 = 1.0 / (d_in2 ** 0.5)
    w2 = jax.random.uniform(
        kw2, (d_out2, d_in2), minval=-bound2, maxval=bound2, dtype=jnp.float32
    )
    bb2 = jax.random.uniform(
        kb2, (d_out2,), minval=-bound2, maxval=bound2, dtype=jnp.float32
    )
    out2 = jax.block_until_ready(
        logistic_regression_forward(x2, w2, bb2, tm=8, tn=128, tk=128)
    )
    ref2 = x2 @ w2.T + bb2
    assert out2.shape == (b2, d_out2)
    assert jnp.allclose(out2, ref2, atol=1e-4, rtol=1e-4)

    print("KERNEL_OK")
</pallas_src>

<mosaic_0001>
module attributes {stable_mosaic.version = 11 : i64} {
  func.func @_linear_kernel(%arg0: i32, %arg1: i32, %arg2: i32, %arg3: memref<8x128xf32, #tpu.memory_space<vmem>>, %arg4: memref<128x128xf32, #tpu.memory_space<vmem>>, %arg5: memref<1x128xf32, #tpu.memory_space<vmem>>, %arg6: memref<8x128xf32, #tpu.memory_space<vmem>>, %arg7: memref<8x128xf32, #tpu.memory_space<vmem>>) attributes {dimension_semantics = [#tpu.dimension_semantics<parallel>, #tpu.dimension_semantics<parallel>, #tpu.dimension_semantics<arbitrary>], iteration_bounds = array<i64: 1, 1, 1>, scalar_prefetch = 0 : i64, scratch_operands = 1 : i64, tpu.core_type = #tpu.core_type<tc>, window_params = [{transform_indices = @transform_0, window_bounds = array<i64: 8, 128>}, {transform_indices = @transform_1, window_bounds = array<i64: 128, 128>}, {transform_indices = @transform_2, window_bounds = array<i64: 1, 128>}, {transform_indices = @transform_3, window_bounds = array<i64: 8, 128>}]} {
    %c0_i32 = arith.constant 0 : i32
    %0 = arith.cmpi eq, %arg2, %c0_i32 : i32
    %1 = arith.extui %0 : i1 to i32
    %c0_i32_0 = arith.constant 0 : i32
    %2 = arith.cmpi ne, %1, %c0_i32_0 : i32
    scf.if %2 {
      %c0_10 = arith.constant 0 : index
      %c0_11 = arith.constant 0 : index
      %12 = vector.load %arg5[%c0_10, %c0_11] : memref<1x128xf32, #tpu.memory_space<vmem>>, vector<1x128xf32>
      %13 = vector.shape_cast %12 : vector<1x128xf32> to vector<1x128xf32>
      %14 = vector.broadcast %13 : vector<1x128xf32> to vector<8x128xf32>
      %c0_12 = arith.constant 0 : index
      %c0_13 = arith.constant 0 : index
      %15 = vector.load %arg7[%c0_12, %c0_13] : memref<8x128xf32, #tpu.memory_space<vmem>>, vector<8x128xf32>
      tpu.vector_store %arg7[%c0_12, %c0_13], %14 {strides = array<i32>} : memref<8x128xf32, #tpu.memory_space<vmem>>, vector<8x128xf32>,
    } else {
    }
    %c0 = arith.constant 0 : index
    %c0_1 = arith.constant 0 : index
    %3 = vector.load %arg7[%c0, %c0_1] : memref<8x128xf32, #tpu.memory_space<vmem>>, vector<8x128xf32>
    %c0_2 = arith.constant 0 : index
    %c0_3 = arith.constant 0 : index
    %4 = vector.load %arg3[%c0_2, %c0_3] : memref<8x128xf32, #tpu.memory_space<vmem>>, vector<8x128xf32>
    %c0_4 = arith.constant 0 : index
    %c0_5 = arith.constant 0 : index
    %5 = vector.load %arg4[%c0_4, %c0_5] : memref<128x128xf32, #tpu.memory_space<vmem>>, vector<128x128xf32>
    %cst = arith.constant dense<0.000000e+00> : vector<8x128xf32>
    %6 = tpu.matmul %4, %5, %cst {dimension_numbers = #tpu.dot_dimension_numbers<[1], [0], [0], [1], [0, 0, 1, 1], [], []>} : vector<8x128xf32>, vector<128x128xf32>, vector<8x128xf32> -> vector<8x128xf32>
    %7 = arith.addf %3, %6 : vector<8x128xf32>
    %c0_6 = arith.constant 0 : index
    %c0_7 = arith.constant 0 : index
    %8 = vector.load %arg7[%c0_6, %c0_7] : memref<8x128xf32, #tpu.memory_space<vmem>>, vector<8x128xf32>
    tpu.vector_store %arg7[%c0_6, %c0_7], %7 {strides = array<i32>} : memref<8x128xf32, #tpu.memory_space<vmem>>, vector<8x128xf32>,
    %c0_i32_8 = arith.constant 0 : i32
    %9 = arith.cmpi eq, %arg2, %c0_i32_8 : i32
    %10 = arith.extui %9 : i1 to i32
    %c0_i32_9 = arith.constant 0 : i32
    %11 = arith.cmpi ne, %10, %c0_i32_9 : i32
    scf.if %11 {
      %c0_10 = arith.constant 0 : index
      %c0_11 = arith.constant 0 : index
      %12 = vector.load %arg7[%c0_10, %c0_11] : memref<8x128xf32, #tpu.memory_space<vmem>>, vector<8x128xf32>
      %c0_12 = arith.constant 0 : index
      %c0_13 = arith.constant 0 : index
      %13 = vector.load %arg6[%c0_12, %c0_13] : memref<8x128xf32, #tpu.memory_space<vmem>>, vector<8x128xf32>
      tpu.vector_store %arg6[%c0_12, %c0_13], %12 {strides = array<i32>} : memref<8x128xf32, #tpu.memory_space<vmem>>, vector<8x128xf32>,
    } else {
    }
    return
  }
  func.func @transform_0(%arg0: i32, %arg1: i32, %arg2: i32) -> (i32, i32) {
    %c0_i32 = arith.constant 0 : i32
    return %arg0, %arg2 : i32, i32
  }
  func.func @transform_1(%arg0: i32, %arg1: i32, %arg2: i32) -> (i32, i32) {
    %c0_i32 = arith.constant 0 : i32
    return %arg2, %arg1 : i32, i32
  }
  func.func @transform_2(%arg0: i32, %arg1: i32, %arg2: i32) -> (i32, i32) {
    %c0_i32 = arith.constant 0 : i32
    %c0_i32_0 = arith.constant 0 : i32
    return %c0_i32, %arg1 : i32, i32
  }
  func.func @transform_3(%arg0: i32, %arg1: i32, %arg2: i32) -> (i32, i32) {
    %c0_i32 = arith.constant 0 : i32
    return %arg0, %arg1 : i32, i32
  }
}

</mosaic_0001>

<llo_original>
// kernel: tpu_custom_call.1
$region0: #{tpu_custom_call.1}
  #allocation0 [shape = 'u32[]', space=smem, size = 0x4, offset = 0x4, fixed_abs, tag = 'smem constant byte address 0x4 - core index']
  #allocation1 [shape = 'u32[144,128]{1,0:T(1,128)}', space=vmem, size = 0x12000, scoped, tag = 'internal scratch']
  #allocation2 [shape = 'f32[8,128]{1,0:T(8,128)}', space=vmem, size = 0x1000, scoped, tag = 'scratch operand']
  %s0 = inlined_call_operand.hbm [shape: f32[8,128], index: 0, kind: input, shape index: {}]
  %s1 = inlined_call_operand.hbm [shape: f32[128,128], index: 1, kind: input, shape index: {}]
  %s2 = inlined_call_operand.vmem [shape: f32[1,128], index: 2, kind: input, shape index: {}]
  %s3 = inlined_call_operand.hbm [shape: f32[8,128], index: 3, kind: output, shape index: {}]
  %s4 = sld [smem:[#allocation0]]
  $region38: #{tpu_custom_call.1} parent=0
    _
  %s6 = ssub.s32 1, %s4
  %s7 = scalar_select 0, %s6, %s4
  $region1: #{tpu_custom_call.1} parent=0
    #allocation3 [shape = 'u8[4096]{0}', space=vmem, size = 0x1000, scoped, tag = 'input window, operand 0, single buffered']
    #allocation4 [shape = 's32[1]{0}', space=sflag, size = 0x4, scoped, tag = 'scoped memory for tpu_custom_call.1']
    #allocation5 [shape = 's32[1]{0}', space=sflag, size = 0x4, scoped, tag = 'scoped memory for tpu_custom_call.1']
    #allocation6 [shape = 'u8[65536]{0}', space=vmem, size = 0x10000, scoped, tag = 'input window, operand 1, single buffered']
    #allocation7 [shape = 's32[1]{0}', space=sflag, size = 0x4, scoped, tag = 'scoped memory for tpu_custom_call.1']
    #allocation8 [shape = 'u8[4096]{0}', space=vmem, size = 0x1000, scoped, tag = 'output window, operand 0, single buffered']
    %8 = vsyncpa [#allocation4], 0
    %9 = vsyncpa [#allocation7], 0
    %10 = vsyncpa [#allocation5], 0
    // Predicated region
    $region2: #{tpu_custom_call.1} parent=1 // pred_check
      _
    $region3: #{tpu_custom_call.1} parent=1 // pred_check_branch
      %12 = sbr.rel (0) target = $region5
    $region4: #{tpu_custom_call.1} parent=1 // pred_region
      %s14 = ssub.s32 128, 128
      %15 = vsyncadd [#allocation4], %s14
      %s17 = sshll.u32 [#allocation3], 4
      %s18 = int_to_ptr.vmem [resolvable:$true] %s17
      %20 = dma.hbm_to_vmem [thread:$0]  %s0, 128, %s18, [#allocation4]
    $region5: #{tpu_custom_call.1} parent=1 // pred_fallthru
      _
    // Predicated region
    $region6: #{tpu_custom_call.1} parent=1 // pred_check
      _
    $region7: #{tpu_custom_call.1} parent=1 // pred_check_branch
      %22 = sbr.rel (0) target = $region9
    $region8: #{tpu_custom_call.1} parent=1 // pred_region
      %s24 = ssub.s32 2048, 2048
      %25 = vsyncadd [#allocation7], %s24
      %s26 = sshll.u32 [#allocation6], 4
      %s27 = int_to_ptr.vmem [resolvable:$true] %s26
      %32 = dma.hbm_to_vmem [thread:$0]  %s1, 2048, %s27, [#allocation7], 128, 128, 8
    $region9: #{tpu_custom_call.1} parent=1 // pred_fallthru
      _
    // Predicated region
    $region10: #{tpu_custom_call.1} parent=1 // pred_check
      _
    $region11: #{tpu_custom_call.1} parent=1 // pred_check_branch
      %34 = sbr.rel (0) target = $region13
    $region12: #{tpu_custom_call.1} parent=1 // pred_region
      _
    $region13: #{tpu_custom_call.1} parent=1 // pred_fallthru
      _
    // Predicated region
    $region14: #{tpu_custom_call.1} parent=1 // pred_check
      _
    $region15: #{tpu_custom_call.1} parent=1 // pred_check_branch
      %36 = sbr.rel (0) target = $region17
    $region16: #{tpu_custom_call.1} parent=1 // pred_region
      %37 = dma.done [#allocation4], 128
    $region17: #{tpu_custom_call.1} parent=1 // pred_fallthru
      _
    // Predicated region
    $region18: #{tpu_custom_call.1} parent=1 // pred_check
      _
    $region19: #{tpu_custom_call.1} parent=1 // pred_check_branch
      %39 = sbr.rel (0) target = $region21
    $region20: #{tpu_custom_call.1} parent=1 // pred_region
      %40 = dma.done [#allocation7], 2048
    $region21: #{tpu_custom_call.1} parent=1 // pred_fallthru
      _
    %p41 = scmp.eq.s32.totalorder 0, 0
    // Predicated region
    $region22: #{tpu_custom_call.1} parent=1 // pred_check
      %p42 = pneg %p41
    $region23: #{tpu_custom_call.1} parent=1 // pred_check_branch
      %44 = sbr.rel (%p42) target = $region25
    $region24: #{tpu_custom_call.1} parent=1 // pred_region
      %v45 = vld [vmem:[%s2] sm:$0x1]
      %v47 = vlaneseq
      %v48 = vshrl.u32 %v47, 7
      %v49 = vsub.s32 0, %v48
      %v50 = vrot.slane %v45, %v49
      %52 = vst [vmem:[#allocation2] sm:$0xff] %v50
    $region25: #{tpu_custom_call.1} parent=1 // pred_fallthru
      _
    %v53 = vld [vmem:[#allocation2] sm:$0xff]
    %v54 = vld [vmem:[#allocation3] sm:$0xff]
    %v55 = vld [vmem:[#allocation6] sm:$0xff]
    %v56 = vld [vmem:[#allocation6 + $0x8] sm:$0xff]
    %v57 = vld [vmem:[#allocation6 + $0x10] sm:$0xff]
    %v58 = vld [vmem:[#allocation6 + $0x18] sm:$0xff]
    %v59 = vld [vmem:[#allocation6 + $0x20] sm:$0xff]
    %v60 = vld [vmem:[#allocation6 + $0x28] sm:$0xff]
    %v61 = vld [vmem:[#allocation6 + $0x30] sm:$0xff]
    %v62 = vld [vmem:[#allocation6 + $0x38] sm:$0xff]
    %v63 = vld [vmem:[#allocation6 + $0x40] sm:$0xff]
    %v64 = vld [vmem:[#allocation6 + $0x48] sm:$0xff]
    %v65 = vld [vmem:[#allocation6 + $0x50] sm:$0xff]
    %v66 = vld [vmem:[#allocation6 + $0x58] sm:$0xff]
    %v67 = vld [vmem:[#allocation6 + $0x60] sm:$0xff]
    %v68 = vld [vmem:[#allocation6 + $0x68] sm:$0xff]
    %v69 = vld [vmem:[#allocation6 + $0x70] sm:$0xff]
    %v70 = vld [vmem:[#allocation6 + $0x78] sm:$0xff]
    %71 = vmatprep.subr.mxu0 0.0
    %72 = vmatpush1.msra.mxu0 %v70
    %73 = vmatprep.subr.mxu0 0.0
    %74 = vmatpush1.msra.mxu0 %v69
    %75 = vmatprep.subr.mxu0 0.0
    %76 = vmatpush1.msra.mxu0 %v68
    %77 = vmatprep.subr.mxu0 0.0
    %78 = vmatpush1.msra.mxu0 %v67
    %79 = vmatprep.subr.mxu0 0.0
    %80 = vmatpush1.msra.mxu0 %v66
    %81 = vmatprep.subr.mxu0 0.0
    %82 = vmatpush1.msra.mxu0 %v65
    %83 = vmatprep.subr.mxu0 0.0
    %84 = vmatpush1.msra.mxu0 %v64
    %85 = vmatprep.subr.mxu0 0.0
    %86 = vmatpush1.msra.mxu0 %v63
    %87 = vmatprep.subr.mxu0 0.0
    %88 = vmatpush1.msra.mxu0 %v62
    %89 = vmatprep.subr.mxu0 0.0
    %90 = vmatpush1.msra.mxu0 %v61
    %91 = vmatprep.subr.mxu0 0.0
    %92 = vmatpush1.msra.mxu0 %v60
    %93 = vmatprep.subr.mxu0 0.0
    %94 = vmatpush1.msra.mxu0 %v59
    %95 = vmatprep.subr.mxu0 0.0
    %96 = vmatpush1.msra.mxu0 %v58
    %97 = vmatprep.subr.mxu0 0.0
    %98 = vmatpush1.msra.mxu0 %v57
    %99 = vmatprep.subr.mxu0 0.0
    %100 = vmatpush1.msra.mxu0 %v56
    %101 = vmatprep.subr.mxu0 0.0
    %102 = vmatpush1.msra.mxu0 %v55
    %103 = vmatprep.subr.mxu0 0.0
    %104 = vmatpush2.msra.mxu0 0.0
    %105 = vmatprep.subr.mxu0 0.0
    %106 = vmatpush2.msra.mxu0 0.0
    %107 = vmatprep.subr.mxu0 0.0
    %108 = vmatpush2.msra.mxu0 0.0
    %109 = vmatprep.subr.mxu0 0.0
    %110 = vmatpush2.msra.mxu0 0.0
    %111 = vmatprep.subr.mxu0 0.0
    %112 = vmatpush2.msra.mxu0 0.0
    %113 = vmatprep.subr.mxu0 0.0
    %114 = vmatpush2.msra.mxu0 0.0
    %115 = vmatprep.subr.mxu0 0.0
    %116 = vmatpush2.msra.mxu0 0.0
    %117 = vmatprep.subr.mxu0 0.0
    %118 = vmatpush2.msra.mxu0 0.0
    %119 = vmatprep.subr.mxu0 0.0
    %120 = vmatpush2.msra.mxu0 0.0
    %121 = vmatprep.subr.mxu0 0.0
    %122 = vmatpush2.msra.mxu0 0.0
    %123 = vmatprep.subr.mxu0 0.0
    %124 = vmatpush2.msra.mxu0 0.0
    %125 = vmatprep.subr.mxu0 0.0
    %126 = vmatpush2.msra.mxu0 0.0
    %127 = vmatprep.subr.mxu0 0.0
    %128 = vmatpush2.msra.mxu0 0.0
    %129 = vmatprep.subr.mxu0 0.0
    %130 = vmatpush2.msra.mxu0 0.0
    %131 = vmatprep.subr.mxu0 0.0
    %132 = vmatpush2.msra.mxu0 0.0
    %133 = vmatprep.subr.mxu0 0.0
    %134 = vmatpush2.msra.mxu0 0.0
    %135 = vmatprep.mubr.f32.mxu0 0.0
    %136 = vmatmul.mubr.f32.gmra.mxu0 %v54
    %v137 = vpop.f32.mrf.mxu0
    %v138 = vadd.f32 0.0, %v137
    %v139 = vpop.f32.mrf.mxu0
    %140 = vdwg.mxu0
    %v141 = vadd.f32 %v53, %v138
    %142 = vst [vmem:[#allocation2] sm:$0xff] %v141
    // Predicated region
    $region26: #{tpu_custom_call.1} parent=1 // pred_check
      %p143 = pneg %p41
    $region27: #{tpu_custom_call.1} parent=1 // pred_check_branch
      %145 = sbr.rel (%p143) target = $region29
    $region28: #{tpu_custom_call.1} parent=1 // pred_region
      %v146 = vld [vmem:[#allocation2] sm:$0xff]
      %147 = vst [vmem:[#allocation8] sm:$0xff] %v146
    $region29: #{tpu_custom_call.1} parent=1 // pred_fallthru
      _
    // Predicated region
    $region30: #{tpu_custom_call.1} parent=1 // pred_check
      _
    $region31: #{tpu_custom_call.1} parent=1 // pred_check_branch
      %149 = sbr.rel (0) target = $region33
    $region32: #{tpu_custom_call.1} parent=1 // pred_region
      %s151 = ssub.s32 128, 128
      %152 = vsyncadd [#allocation5], %s151
      %s154 = sshll.u32 [#allocation8], 4
      %s155 = int_to_ptr.vmem [resolvable:$true] %s154
      %157 = dma.vmem_to_hbm [thread:$0]  %s155, 128, %s3, [#allocation5]
    $region33: #{tpu_custom_call.1} parent=1 // pred_fallthru
      _
    // Predicated region
    $region34: #{tpu_custom_call.1} parent=1 // pred_check
      _
    $region35: #{tpu_custom_call.1} parent=1 // pred_check_branch
      %159 = sbr.rel (0) target = $region37
    $region36: #{tpu_custom_call.1} parent=1 // pred_region
      %160 = dma.done [#allocation5], 128
    $region37: #{tpu_custom_call.1} parent=1 // pred_fallthru
      _
    %161 = vsyncpa [#allocation4], 1
    %162 = vsyncpa [#allocation7], 1
    %163 = vsyncpa [#allocation5], 1

</llo_original>
